<compile_context>
chip_gen: v5e
topology: v5e:2x2
jax: 0.10.0
libtpu: 0.0.40
codegen_flags: <defaults>
</compile_context>

<pallas_src>
import functools

import jax
import jax.numpy as jnp
import numpy as np
from jax.experimental import pallas as pl
from jax.experimental.pallas import tpu as pltpu


# ----------------------------- Pallas kernel ------------------------------- #

def _fused_disjoint_loss_kernel(x_ref, y_ref, sel_ref, mask_ref, o_ref,
                                num_i_ref, den_i_ref, num_d_ref, den_d_ref, *,
                                tile_p, n_impl_tiles, n_dis_tiles, inv_b, inv_bc):
    p = pl.program_id(1)                       # pair-tile index (reduction axis, last)

    @pl.when(p == 0)
    def _init():
        num_i_ref[...] = jnp.zeros_like(num_i_ref)
        den_i_ref[...] = jnp.zeros_like(den_i_ref)
        num_d_ref[...] = jnp.zeros_like(num_d_ref)
        den_d_ref[...] = jnp.zeros_like(den_d_ref)

    # -- ONE MXU matmul gathers both L and R pair logits for this pair tile --------
    # sel block = [L onehots | R onehots] for this tile; bf16 0/1 columns are exact.
    lr = jnp.dot(x_ref[...], sel_ref[...], preferred_element_type=jnp.float32)
    l_log = lr[:, :tile_p]                     # static 128-aligned lane slices
    r_log = lr[:, tile_p:]

    # bf16 transcendental (EUP) path; reductions stay in f32.
    l_sig = jax.nn.sigmoid(l_log.astype(jnp.bfloat16))
    r_sig = jax.nn.sigmoid(r_log.astype(jnp.bfloat16))
    mask = mask_ref[...]                       # (1, TP) f32, 0.0 on padded pair lanes

    def _accumulate(r_val, num_ref, den_ref):
        # d = relu(sig(l) - rhs) is in [0, 1]  ->  exp(d) needs no max subtraction.
        d = jnp.maximum(l_sig - r_val, 0.0)                    # bf16 (TB, TP)
        e32 = jnp.exp(d).astype(jnp.float32) * mask            # pads excluded from denom
        d32 = d.astype(jnp.float32)
        den_ref[...] += jnp.sum(e32, axis=-1, keepdims=True)
        num_ref[...] += jnp.sum(e32 * d32, axis=-1, keepdims=True)

    # Each pair tile belongs entirely to one branch (per-branch padding to TP), so
    # only one branch's (TB, TP) intermediates are live per grid step.
    @pl.when(p < n_impl_tiles)
    def _impl():
        _accumulate(r_sig, num_i_ref, den_i_ref)

    @pl.when(p >= n_impl_tiles)
    def _dis():
        _accumulate(1.0 - r_sig, num_d_ref, den_d_ref)

    @pl.when(p == pl.num_programs(1) - 1)
    def _finalize():
        # BCE-with-logits on the resident activation tile (once per batch tile).
        # Padded batch rows (-100 logits / 0 targets) contribute exactly 0.
        x32 = x_ref[...].astype(jnp.float32)
        y32 = y_ref[...].astype(jnp.float32)
        bce = jnp.maximum(x32, 0.0) - x32 * y32 + jnp.log(1.0 + jnp.exp(-jnp.abs(x32)))
        bce_sum = jnp.sum(jnp.sum(bce, axis=-1, keepdims=True), axis=0, keepdims=True)

        # den >= (#valid pairs in branch) >= 1 for every row, so the approx
        # reciprocal never sees zero (empty branches are skipped at trace time).
        per_row = jnp.zeros_like(num_i_ref[...])
        if n_impl_tiles > 0:
            per_row = per_row + num_i_ref[...] * pl.reciprocal(den_i_ref[...], approx=True)
        if n_dis_tiles > 0:
            per_row = per_row + num_d_ref[...] * pl.reciprocal(den_d_ref[...], approx=True)
        pair_sum = jnp.sum(per_row, axis=0, keepdims=True)     # (1, 1)

        total = bce_sum * inv_bc + pair_sum * inv_b            # (1, 1)
        o_ref[0] = jnp.broadcast_to(total, (1, 128))           # lane-dense partial


# ------------------------------ JAX wrapper -------------------------------- #

def _round_up(x, m):
    return (x + m - 1) // m * m


def make_disjoint_loss(impl_l, impl_r, dis_l, dis_r, num_classes, *,
                       tile_b=128, tile_p=1024):
    """Build a jitted DisjointLoss.forward (base_loss = BCEWithLogitsLoss, mean).

    The implication / disjointness index pairs stand in for the filters the torch
    module builds in __init__ from chebi.cache / label-name / disjointness files.
    """
    impl_l = np.asarray(impl_l, dtype=np.int64)
    impl_r = np.asarray(impl_r, dtype=np.int64)
    dis_l = np.asarray(dis_l, dtype=np.int64)
    dis_r = np.asarray(dis_r, dtype=np.int64)
    n_impl = int(impl_l.shape[0])
    n_dis = int(dis_l.shape[0])
    assert n_impl + n_dis >= 1, "need at least one implication or disjointness pair"

    # pair-tile size: multiple of 128, no larger than the biggest branch needs
    tp = max(128, min(_round_up(tile_p, 128), _round_up(max(n_impl, n_dis, 1), 128)))
    pi_pad = _round_up(n_impl, tp) if n_impl else 0
    pd_pad = _round_up(n_dis, tp) if n_dis else 0
    n_ti = pi_pad // tp                       # implication pair tiles (first)
    n_td = pd_pad // tp                       # disjointness pair tiles (second)
    npt = n_ti + n_td
    p_total = pi_pad + pd_pad

    # Concatenated selection matrix (C, 2*P_total): for pair tile t, columns
    # [2*tp*t : 2*tp*t+tp] are the L one-hots and [2*tp*t+tp : 2*tp*(t+1)] the R
    # one-hots of that tile's pairs.  Pair-lane validity mask is (1, P_total).
    # TODO(synk): for very large P build/stream this per-tile (or use a DMA gather)
    # instead of one dense host-side matrix.
    sel = np.zeros((num_classes, 2 * p_total), dtype=np.float32)
    msk = np.zeros((1, max(p_total, tp)), dtype=np.float32)[:, :p_total]

    def _place(l_idx, r_idx, tile_offset):
        n = int(l_idx.shape[0])
        if n == 0:
            return
        g = np.arange(n)
        t = tile_offset + g // tp
        lane = g % tp
        sel[l_idx, 2 * tp * t + lane] = 1.0
        sel[r_idx, 2 * tp * t + tp + lane] = 1.0
        msk[0, t * tp + lane] = 1.0

    _place(impl_l, impl_r, 0)
    _place(dis_l, dis_r, n_ti)
    sel_cat = jnp.asarray(sel, dtype=jnp.bfloat16)      # 0/1 exact in bf16
    pair_mask = jnp.asarray(msk, dtype=jnp.float32)

    # TODO(synk): the `non_null_labels` row-subset path of ImplicationLoss.forward and
    # pluggable base_loss modules are not implemented (BCEWithLogitsLoss-mean assumed).
    @jax.jit
    def loss_fn(logits, target):
        b, c = logits.shape
        assert c == num_classes

        tb = min(_round_up(tile_b, 16), _round_up(b, 16))
        b_pad = _round_up(b, tb)
        nb = b_pad // tb

        # bf16 in HBM (halves DMA bytes); f32 accumulation inside the kernel.
        # Pad rows get logits=-100 / targets=0 so their BCE and pair terms are 0.
        xb = logits.astype(jnp.bfloat16)
        yb = target.astype(jnp.bfloat16)
        if b_pad != b:
            xb = jnp.pad(xb, ((0, b_pad - b), (0, 0)), constant_values=-100.0)
            yb = jnp.pad(yb, ((0, b_pad - b), (0, 0)))

        # explicit scoped-VMEM budget from the actual buffer sizes (never below the
        # 32 MiB default, capped at v7x's 64 MiB physical VMEM)
        est = (2 * 2 * tb * c * 2              # x, y tiles, double-buffered, bf16
               + 2 * c * (2 * tp) * 2          # concatenated selection block (x2 bufs)
               + 2 * 8 * tp * 4                # pair-lane mask block
               + 2 * 8 * 128 * 4               # output block
               + 4 * max(tb, 8) * 128 * 4      # scratch accumulators (lane padded)
               + 10 * tb * tp * 4)             # live (TB, TP)/(TB, 2TP) intermediates
        vmem_limit = int(min(max(est * 3 // 2, 32 << 20), 64 << 20))

        kernel = functools.partial(
            _fused_disjoint_loss_kernel,
            tile_p=tp, n_impl_tiles=n_ti, n_dis_tiles=n_td,
            inv_b=1.0 / b, inv_bc=1.0 / (b * c))

        partials = pl.pallas_call(
            kernel,
            grid=(nb, npt),                                    # pair axis last (reduction)
            in_specs=[
                pl.BlockSpec((tb, c), lambda i, p: (i, 0)),            # logits tile
                pl.BlockSpec((tb, c), lambda i, p: (i, 0)),            # target tile
                pl.BlockSpec((num_classes, 2 * tp), lambda i, p: (0, p)),  # [L|R] onehots
                pl.BlockSpec((1, tp), lambda i, p: (0, p)),            # pair validity mask
            ],
            out_specs=pl.BlockSpec((1, 1, 128), lambda i, p: (i, 0, 0)),
            out_shape=jax.ShapeDtypeStruct((nb, 1, 128), jnp.float32),
            scratch_shapes=[pltpu.VMEM((tb, 1), jnp.float32) for _ in range(4)],
            compiler_params=pltpu.CompilerParams(
                dimension_semantics=("parallel", "arbitrary"),
                vmem_limit_bytes=vmem_limit),
        )(xb, yb, sel_cat, pair_mask)

        # tiny final reduction over per-batch-tile partial sums
        return jnp.sum(partials[:, 0, 0])

    return loss_fn


# --------------------------- pure-JAX reference ----------------------------- #

def _ref_impl_term(l, r):
    d = jnp.maximum(l - r, 0.0)
    sm = jax.nn.softmax(d, axis=-1)
    return jnp.mean(jnp.sum(sm * d, axis=-1), axis=0)


def disjoint_loss_ref(logits, target, impl_l, impl_r, dis_l, dis_r):
    # reference operates on the same bf16-rounded activations the kernel reads,
    # but keeps all transcendentals in f32
    x = logits.astype(jnp.bfloat16).astype(jnp.float32)
    y = target.astype(jnp.float32)
    bce = jnp.mean(jnp.maximum(x, 0.0) - x * y + jnp.log(1.0 + jnp.exp(-jnp.abs(x))))
    pred = jax.nn.sigmoid(x)
    impl = _ref_impl_term(pred[:, impl_l], pred[:, impl_r])
    dis = _ref_impl_term(pred[:, dis_l], 1.0 - pred[:, dis_r])
    return bce + impl + dis


# ---------------------------------- main ------------------------------------ #

if __name__ == "__main__":
    B, C = 2, 32  # batch, number of labels

    key = jax.random.PRNGKey(0)
    k_x, k_t = jax.random.split(key)
    logits = jax.random.normal(k_x, (B, C), dtype=jnp.float32)
    target = (jax.random.uniform(k_t, (B, C)) > 0.5).astype(jnp.float32)

    # Deterministic synthetic class hierarchy / disjointness (stand-in for the
    # chebi.cache / label-name / disjointness files the torch module loads):
    #   implication pairs: label i implies its "parent" i // 2
    #   disjointness pairs: siblings (2i, 2i+1)
    impl_pairs = np.array([(i, i // 2) for i in range(1, C)], dtype=np.int32)
    dis_pairs = np.array([(2 * i, 2 * i + 1) for i in range(C // 4)], dtype=np.int32)
    impl_l, impl_r = impl_pairs[:, 0], impl_pairs[:, 1]
    dis_l, dis_r = dis_pairs[:, 0], dis_pairs[:, 1]

    loss_fn = make_disjoint_loss(impl_l, impl_r, dis_l, dis_r, num_classes=C)
    out = jax.block_until_ready(loss_fn(logits, target))

    ref = disjoint_loss_ref(logits, target, impl_l, impl_r, dis_l, dis_r)
    # bf16 activations are shared with the reference; the remaining delta is the
    # deliberate bf16 sigmoid/exp (EUP) path on the pair terms (~2^-9 relative) and
    # the approximate EUP reciprocal in the softmax normalization (~2^-12 relative).
    np.testing.assert_allclose(np.asarray(out), np.asarray(ref), rtol=1e-2, atol=5e-3)

    print("KERNEL_OK")
</pallas_src>

<mosaic_0001>
module attributes {stable_mosaic.version = 11 : i64} {
  func.func @_fused_disjoint_loss_kernel(%arg0: i32, %arg1: i32, %arg2: memref<16x32xbf16, #tpu.memory_space<vmem>>, %arg3: memref<16x32xbf16, #tpu.memory_space<vmem>>, %arg4: memref<32x256xbf16, #tpu.memory_space<vmem>>, %arg5: memref<1x128xf32, #tpu.memory_space<vmem>>, %arg6: memref<1x1x128xf32, #tpu.memory_space<vmem>>, %arg7: memref<16x1xf32, #tpu.memory_space<vmem>>, %arg8: memref<16x1xf32, #tpu.memory_space<vmem>>, %arg9: memref<16x1xf32, #tpu.memory_space<vmem>>, %arg10: memref<16x1xf32, #tpu.memory_space<vmem>>) attributes {dimension_semantics = [#tpu.dimension_semantics<parallel>, #tpu.dimension_semantics<arbitrary>], iteration_bounds = array<i64: 1, 2>, scalar_prefetch = 0 : i64, scratch_operands = 4 : i64, tpu.core_type = #tpu.core_type<tc>, window_params = [{transform_indices = @transform_0, window_bounds = array<i64: 16, 32>}, {transform_indices = @transform_1, window_bounds = array<i64: 16, 32>}, {transform_indices = @transform_2, window_bounds = array<i64: 32, 256>}, {transform_indices = @transform_3, window_bounds = array<i64: 1, 128>}, {transform_indices = @transform_4, window_bounds = array<i64: 1, 1, 128>}]} {
    %c0_i32 = arith.constant 0 : i32
    %0 = arith.cmpi eq, %arg1, %c0_i32 : i32
    %1 = arith.extui %0 : i1 to i32
    %c0_i32_0 = arith.constant 0 : i32
    %2 = arith.cmpi ne, %1, %c0_i32_0 : i32
    scf.if %2 {
      %cst_13 = arith.constant 0.000000e+00 : f32
      %30 = vector.broadcast %cst_13 : f32 to vector<16x1xf32>
      %c0_14 = arith.constant 0 : index
      %c0_15 = arith.constant 0 : index
      %31 = vector.load %arg7[%c0_14, %c0_15] : memref<16x1xf32, #tpu.memory_space<vmem>>, vector<16x1xf32>
      tpu.vector_store %arg7[%c0_14, %c0_15], %30 {strides = array<i32>} : memref<16x1xf32, #tpu.memory_space<vmem>>, vector<16x1xf32>,
      %cst_16 = arith.constant 0.000000e+00 : f32
      %32 = vector.broadcast %cst_16 : f32 to vector<16x1xf32>
      %c0_17 = arith.constant 0 : index
      %c0_18 = arith.constant 0 : index
      %33 = vector.load %arg8[%c0_17, %c0_18] : memref<16x1xf32, #tpu.memory_space<vmem>>, vector<16x1xf32>
      tpu.vector_store %arg8[%c0_17, %c0_18], %32 {strides = array<i32>} : memref<16x1xf32, #tpu.memory_space<vmem>>, vector<16x1xf32>,
      %cst_19 = arith.constant 0.000000e+00 : f32
      %34 = vector.broadcast %cst_19 : f32 to vector<16x1xf32>
      %c0_20 = arith.constant 0 : index
      %c0_21 = arith.constant 0 : index
      %35 = vector.load %arg9[%c0_20, %c0_21] : memref<16x1xf32, #tpu.memory_space<vmem>>, vector<16x1xf32>
      tpu.vector_store %arg9[%c0_20, %c0_21], %34 {strides = array<i32>} : memref<16x1xf32, #tpu.memory_space<vmem>>, vector<16x1xf32>,
      %cst_22 = arith.constant 0.000000e+00 : f32
      %36 = vector.broadcast %cst_22 : f32 to vector<16x1xf32>
      %c0_23 = arith.constant 0 : index
      %c0_24 = arith.constant 0 : index
      %37 = vector.load %arg10[%c0_23, %c0_24] : memref<16x1xf32, #tpu.memory_space<vmem>>, vector<16x1xf32>
      tpu.vector_store %arg10[%c0_23, %c0_24], %36 {strides = array<i32>} : memref<16x1xf32, #tpu.memory_space<vmem>>, vector<16x1xf32>,
    } else {
    }
    %c0 = arith.constant 0 : index
    %c0_1 = arith.constant 0 : index
    %3 = vector.load %arg2[%c0, %c0_1] : memref<16x32xbf16, #tpu.memory_space<vmem>>, vector<16x32xbf16>
    %c0_2 = arith.constant 0 : index
    %c0_3 = arith.constant 0 : index
    %4 = vector.load %arg4[%c0_2, %c0_3] : memref<32x256xbf16, #tpu.memory_space<vmem>>, vector<32x256xbf16>
    %cst = arith.constant dense<0.000000e+00> : vector<16x256xf32>
    %5 = tpu.matmul %3, %4, %cst {dimension_numbers = #tpu.dot_dimension_numbers<[1], [0], [0], [1], [0, 0, 1, 1], [], []>} : vector<16x32xbf16>, vector<32x256xbf16>, vector<16x256xf32> -> vector<16x256xf32>
    %6 = vector.extract_strided_slice %5 {offsets = [0, 0], sizes = [16, 128], strides = [1, 1]} : vector<16x256xf32> to vector<16x128xf32>
    %7 = vector.extract_strided_slice %5 {offsets = [0, 128], sizes = [16, 128], strides = [1, 1]} : vector<16x256xf32> to vector<16x128xf32>
    %8 = arith.truncf %6 : vector<16x128xf32> to vector<16x128xbf16>
    %9 = arith.negf %8 : vector<16x128xbf16>
    %10 = math.exp %9 : vector<16x128xbf16>
    %cst_4 = arith.constant 1.000000e+00 : bf16
    %11 = vector.broadcast %cst_4 : bf16 to vector<16x128xbf16>
    %12 = arith.addf %11, %10 : vector<16x128xbf16>
    %13 = arith.divf %11, %12 : vector<16x128xbf16>
    %14 = arith.truncf %7 : vector<16x128xf32> to vector<16x128xbf16>
    %15 = arith.negf %14 : vector<16x128xbf16>
    %16 = math.exp %15 : vector<16x128xbf16>
    %cst_5 = arith.constant 1.000000e+00 : bf16
    %17 = vector.broadcast %cst_5 : bf16 to vector<16x128xbf16>
    %18 = arith.addf %17, %16 : vector<16x128xbf16>
    %19 = arith.divf %17, %18 : vector<16x128xbf16>
    %c0_6 = arith.constant 0 : index
    %c0_7 = arith.constant 0 : index
    %20 = vector.load %arg5[%c0_6, %c0_7] : memref<1x128xf32, #tpu.memory_space<vmem>>, vector<1x128xf32>
    %c1_i32 = arith.constant 1 : i32
    %21 = arith.cmpi slt, %arg1, %c1_i32 : i32
    %22 = arith.extui %21 : i1 to i32
    %c0_i32_8 = arith.constant 0 : i32
    %23 = arith.cmpi ne, %22, %c0_i32_8 : i32
    scf.if %23 {
      %30 = arith.subf %13, %19 : vector<16x128xbf16>
      %cst_13 = arith.constant 0.000000e+00 : bf16
      %31 = vector.broadcast %cst_13 : bf16 to vector<16x128xbf16>
      %32 = arith.maximumf %30, %31 : vector<16x128xbf16>
      %33 = math.exp %32 : vector<16x128xbf16>
      %34 = arith.extf %33 : vector<16x128xbf16> to vector<16x128xf32>
      %35 = vector.broadcast %20 : vector<1x128xf32> to vector<16x128xf32>
      %36 = arith.mulf %34, %35 : vector<16x128xf32>
      %37 = arith.extf %32 : vector<16x128xbf16> to vector<16x128xf32>
      %c0_14 = arith.constant 0 : index
      %c0_15 = arith.constant 0 : index
      %38 = vector.load %arg8[%c0_14, %c0_15] : memref<16x1xf32, #tpu.memory_space<vmem>>, vector<16x1xf32>
      %cst_16 = arith.constant dense<0.000000e+00> : vector<16xf32>
      %39 = vector.multi_reduction <add>, %36, %cst_16 [1] : vector<16x128xf32> to vector<16xf32>
      %40 = vector.shape_cast %39 : vector<16xf32> to vector<16x1xf32>
      %41 = arith.addf %38, %40 : vector<16x1xf32>
      %c0_17 = arith.constant 0 : index
      %c0_18 = arith.constant 0 : index
      %42 = vector.load %arg8[%c0_17, %c0_18] : memref<16x1xf32, #tpu.memory_space<vmem>>, vector<16x1xf32>
      tpu.vector_store %arg8[%c0_17, %c0_18], %41 {strides = array<i32>} : memref<16x1xf32, #tpu.memory_space<vmem>>, vector<16x1xf32>,
      %c0_19 = arith.constant 0 : index
      %c0_20 = arith.constant 0 : index
      %43 = vector.load %arg7[%c0_19, %c0_20] : memref<16x1xf32, #tpu.memory_space<vmem>>, vector<16x1xf32>
      %44 = arith.mulf %36, %37 : vector<16x128xf32>
      %cst_21 = arith.constant dense<0.000000e+00> : vector<16xf32>
      %45 = vector.multi_reduction <add>, %44, %cst_21 [1] : vector<16x128xf32> to vector<16xf32>
      %46 = vector.shape_cast %45 : vector<16xf32> to vector<16x1xf32>
      %47 = arith.addf %43, %46 : vector<16x1xf32>
      %c0_22 = arith.constant 0 : index
      %c0_23 = arith.constant 0 : index
      %48 = vector.load %arg7[%c0_22, %c0_23] : memref<16x1xf32, #tpu.memory_space<vmem>>, vector<16x1xf32>
      tpu.vector_store %arg7[%c0_22, %c0_23], %47 {strides = array<i32>} : memref<16x1xf32, #tpu.memory_space<vmem>>, vector<16x1xf32>,
    } else {
    }
    %c1_i32_9 = arith.constant 1 : i32
    %24 = arith.cmpi sge, %arg1, %c1_i32_9 : i32
    %25 = arith.extui %24 : i1 to i32
    %c0_i32_10 = arith.constant 0 : i32
    %26 = arith.cmpi ne, %25, %c0_i32_10 : i32
    scf.if %26 {
      %cst_13 = arith.constant 1.000000e+00 : bf16
      %30 = vector.broadcast %cst_13 : bf16 to vector<16x128xbf16>
      %31 = arith.subf %30, %19 : vector<16x128xbf16>
      %32 = arith.subf %13, %31 : vector<16x128xbf16>
      %cst_14 = arith.constant 0.000000e+00 : bf16
      %33 = vector.broadcast %cst_14 : bf16 to vector<16x128xbf16>
      %34 = arith.maximumf %32, %33 : vector<16x128xbf16>
      %35 = math.exp %34 : vector<16x128xbf16>
      %36 = arith.extf %35 : vector<16x128xbf16> to vector<16x128xf32>
      %37 = vector.broadcast %20 : vector<1x128xf32> to vector<16x128xf32>
      %38 = arith.mulf %36, %37 : vector<16x128xf32>
      %39 = arith.extf %34 : vector<16x128xbf16> to vector<16x128xf32>
      %c0_15 = arith.constant 0 : index
      %c0_16 = arith.constant 0 : index
      %40 = vector.load %arg10[%c0_15, %c0_16] : memref<16x1xf32, #tpu.memory_space<vmem>>, vector<16x1xf32>
      %cst_17 = arith.constant dense<0.000000e+00> : vector<16xf32>
      %41 = vector.multi_reduction <add>, %38, %cst_17 [1] : vector<16x128xf32> to vector<16xf32>
      %42 = vector.shape_cast %41 : vector<16xf32> to vector<16x1xf32>
      %43 = arith.addf %40, %42 : vector<16x1xf32>
      %c0_18 = arith.constant 0 : index
      %c0_19 = arith.constant 0 : index
      %44 = vector.load %arg10[%c0_18, %c0_19] : memref<16x1xf32, #tpu.memory_space<vmem>>, vector<16x1xf32>
      tpu.vector_store %arg10[%c0_18, %c0_19], %43 {strides = array<i32>} : memref<16x1xf32, #tpu.memory_space<vmem>>, vector<16x1xf32>,
      %c0_20 = arith.constant 0 : index
      %c0_21 = arith.constant 0 : index
      %45 = vector.load %arg9[%c0_20, %c0_21] : memref<16x1xf32, #tpu.memory_space<vmem>>, vector<16x1xf32>
      %46 = arith.mulf %38, %39 : vector<16x128xf32>
      %cst_22 = arith.constant dense<0.000000e+00> : vector<16xf32>
      %47 = vector.multi_reduction <add>, %46, %cst_22 [1] : vector<16x128xf32> to vector<16xf32>
      %48 = vector.shape_cast %47 : vector<16xf32> to vector<16x1xf32>
      %49 = arith.addf %45, %48 : vector<16x1xf32>
      %c0_23 = arith.constant 0 : index
      %c0_24 = arith.constant 0 : index
      %50 = vector.load %arg9[%c0_23, %c0_24] : memref<16x1xf32, #tpu.memory_space<vmem>>, vector<16x1xf32>
      tpu.vector_store %arg9[%c0_23, %c0_24], %49 {strides = array<i32>} : memref<16x1xf32, #tpu.memory_space<vmem>>, vector<16x1xf32>,
    } else {
    }
    %c1_i32_11 = arith.constant 1 : i32
    %27 = arith.cmpi eq, %arg1, %c1_i32_11 : i32
    %28 = arith.extui %27 : i1 to i32
    %c0_i32_12 = arith.constant 0 : i32
    %29 = arith.cmpi ne, %28, %c0_i32_12 : i32
    scf.if %29 {
      %c0_13 = arith.constant 0 : index
      %c0_14 = arith.constant 0 : index
      %30 = vector.load %arg2[%c0_13, %c0_14] : memref<16x32xbf16, #tpu.memory_space<vmem>>, vector<16x32xbf16>
      %31 = arith.extf %30 : vector<16x32xbf16> to vector<16x32xf32>
      %c0_15 = arith.constant 0 : index
      %c0_16 = arith.constant 0 : index
      %32 = vector.load %arg3[%c0_15, %c0_16] : memref<16x32xbf16, #tpu.memory_space<vmem>>, vector<16x32xbf16>
      %33 = arith.extf %32 : vector<16x32xbf16> to vector<16x32xf32>
      %cst_17 = arith.constant 0.000000e+00 : f32
      %34 = vector.broadcast %cst_17 : f32 to vector<16x32xf32>
      %35 = arith.maximumf %31, %34 : vector<16x32xf32>
      %36 = arith.mulf %31, %33 : vector<16x32xf32>
      %37 = arith.subf %35, %36 : vector<16x32xf32>
      %38 = math.absf %31 : vector<16x32xf32>
      %cst_18 = arith.constant 0.000000e+00 : f32
      %39 = vector.broadcast %cst_18 : f32 to vector<16x32xf32>
      %40 = arith.subf %39, %38 : vector<16x32xf32>
      %41 = math.exp %40 : vector<16x32xf32>
      %cst_19 = arith.constant 1.000000e+00 : f32
      %42 = vector.broadcast %cst_19 : f32 to vector<16x32xf32>
      %43 = arith.addf %42, %41 : vector<16x32xf32>
      %44 = math.log %43 : vector<16x32xf32>
      %45 = arith.addf %37, %44 : vector<16x32xf32>
      %cst_20 = arith.constant dense<0.000000e+00> : vector<16xf32>
      %46 = vector.multi_reduction <add>, %45, %cst_20 [1] : vector<16x32xf32> to vector<16xf32>
      %47 = vector.shape_cast %46 : vector<16xf32> to vector<16x1xf32>
      %cst_21 = arith.constant dense<0.000000e+00> : vector<1xf32>
      %48 = vector.multi_reduction <add>, %47, %cst_21 [0] : vector<16x1xf32> to vector<1xf32>
      %49 = vector.shape_cast %48 : vector<1xf32> to vector<1x1xf32>
      %cst_22 = arith.constant 0.000000e+00 : f32
      %50 = vector.broadcast %cst_22 : f32 to vector<16x1xf32>
      %c0_23 = arith.constant 0 : index
      %c0_24 = arith.constant 0 : index
      %51 = vector.load %arg7[%c0_23, %c0_24] : memref<16x1xf32, #tpu.memory_space<vmem>>, vector<16x1xf32>
      %c0_25 = arith.constant 0 : index
      %c0_26 = arith.constant 0 : index
      %52 = vector.load %arg8[%c0_25, %c0_26] : memref<16x1xf32, #tpu.memory_space<vmem>>, vector<16x1xf32>
      %53 = tpu.reciprocal %52 {approx = true} : vector<16x1xf32> -> vector<16x1xf32>
      %54 = arith.mulf %51, %53 : vector<16x1xf32>
      %55 = arith.addf %50, %54 : vector<16x1xf32>
      %c0_27 = arith.constant 0 : index
      %c0_28 = arith.constant 0 : index
      %56 = vector.load %arg9[%c0_27, %c0_28] : memref<16x1xf32, #tpu.memory_space<vmem>>, vector<16x1xf32>
      %c0_29 = arith.constant 0 : index
      %c0_30 = arith.constant 0 : index
      %57 = vector.load %arg10[%c0_29, %c0_30] : memref<16x1xf32, #tpu.memory_space<vmem>>, vector<16x1xf32>
      %58 = tpu.reciprocal %57 {approx = true} : vector<16x1xf32> -> vector<16x1xf32>
      %59 = arith.mulf %56, %58 : vector<16x1xf32>
      %60 = arith.addf %55, %59 : vector<16x1xf32>
      %cst_31 = arith.constant dense<0.000000e+00> : vector<1xf32>
      %61 = vector.multi_reduction <add>, %60, %cst_31 [0] : vector<16x1xf32> to vector<1xf32>
      %62 = vector.shape_cast %61 : vector<1xf32> to vector<1x1xf32>
      %cst_32 = arith.constant 1.562500e-02 : f32
      %63 = vector.broadcast %cst_32 : f32 to vector<1x1xf32>
      %64 = arith.mulf %49, %63 : vector<1x1xf32>
      %cst_33 = arith.constant 5.000000e-01 : f32
      %65 = vector.broadcast %cst_33 : f32 to vector<1x1xf32>
      %66 = arith.mulf %62, %65 : vector<1x1xf32>
      %67 = arith.addf %64, %66 : vector<1x1xf32>
      %68 = vector.shape_cast %67 : vector<1x1xf32> to vector<1x1xf32>
      %69 = vector.broadcast %68 : vector<1x1xf32> to vector<1x128xf32>
      %c0_34 = arith.constant 0 : index
      %c0_35 = arith.constant 0 : index
      %c0_36 = arith.constant 0 : index
      %70 = vector.load %arg6[%c0_34, %c0_35, %c0_36] : memref<1x1x128xf32, #tpu.memory_space<vmem>>, vector<1x1x128xf32>
      %71 = vector.shape_cast %70 : vector<1x1x128xf32> to vector<1x128xf32>
      %72 = vector.shape_cast %69 : vector<1x128xf32> to vector<1x1x128xf32>
      tpu.vector_store %arg6[%c0_34, %c0_35, %c0_36], %72 {strides = array<i32>} : memref<1x1x128xf32, #tpu.memory_space<vmem>>, vector<1x1x128xf32>,
    } else {
    }
    return
  }
  func.func @transform_0(%arg0: i32, %arg1: i32) -> (i32, i32) {
    %c0_i32 = arith.constant 0 : i32
    %c0_i32_0 = arith.constant 0 : i32
    return %arg0, %c0_i32 : i32, i32
  }
  func.func @transform_1(%arg0: i32, %arg1: i32) -> (i32, i32) {
    %c0_i32 = arith.constant 0 : i32
    %c0_i32_0 = arith.constant 0 : i32
    return %arg0, %c0_i32 : i32, i32
  }
  func.func @transform_2(%arg0: i32, %arg1: i32) -> (i32, i32) {
    %c0_i32 = arith.constant 0 : i32
    %c0_i32_0 = arith.constant 0 : i32
    return %c0_i32, %arg1 : i32, i32
  }
  func.func @transform_3(%arg0: i32, %arg1: i32) -> (i32, i32) {
    %c0_i32 = arith.constant 0 : i32
    %c0_i32_0 = arith.constant 0 : i32
    return %c0_i32, %arg1 : i32, i32
  }
  func.func @transform_4(%arg0: i32, %arg1: i32) -> (i32, i32, i32) {
    %c0_i32 = arith.constant 0 : i32
    %c0_i32_0 = arith.constant 0 : i32
    %c0_i32_1 = arith.constant 0 : i32
    return %arg0, %c0_i32, %c0_i32_0 : i32, i32, i32
  }
}

</mosaic_0001>

<llo_original>
// kernel: loss_fn.1
$region0: #{loss_fn.1}
  #allocation0 [shape = 'u32[]', space=smem, size = 0x4, offset = 0x4, fixed_abs, tag = 'smem constant byte address 0x4 - core index']
  #allocation1 [shape = 'u32[72,128]{1,0:T(1,128)}', space=vmem, size = 0x9000, scoped, tag = 'internal scratch']
  #allocation2 [shape = 'f32[16,1]{1,0:T(8,128)}', space=vmem, size = 0x2000, scoped, tag = 'scratch operand']
  #allocation3 [shape = 'f32[16,1]{1,0:T(8,128)}', space=vmem, size = 0x2000, scoped, tag = 'scratch operand']
  #allocation4 [shape = 'f32[16,1]{1,0:T(8,128)}', space=vmem, size = 0x2000, scoped, tag = 'scratch operand']
  #allocation5 [shape = 'f32[16,1]{1,0:T(8,128)}', space=vmem, size = 0x2000, scoped, tag = 'scratch operand']
  %s0 = inlined_call_operand.vmem [shape: bf16[16,32], index: 0, kind: input, shape index: {}]
  %s1 = inlined_call_operand.vmem [shape: bf16[16,32], index: 1, kind: input, shape index: {}]
  %s2 = inlined_call_operand.hbm [shape: bf16[32,512], index: 2, kind: input, shape index: {}]
  %s3 = inlined_call_operand.vmem [shape: f32[1,256], index: 3, kind: input, shape index: {}]
  %s4 = inlined_call_operand.hbm [shape: f32[1,1,128], index: 4, kind: output, shape index: {}]
  %s5 = sld [smem:[#allocation0]]
  $region69: #{loss_fn.1} parent=0
    _
  %s7 = ssub.s32 1, %s5
  %s8 = scalar_select 0, %s7, %s5
  $region1: #{loss_fn.1} parent=0
    #allocation6 [shape = 'u8[32768]{0}', space=vmem, size = 0x8000, scoped, tag = 'input window, operand 2']
    #allocation7 [shape = 's32[2]{0}', space=sflag, size = 0x8, scoped, tag = 'scoped memory for loss_fn.1']
    #allocation8 [shape = 's32[2]{0}', space=sflag, size = 0x8, scoped, tag = 'scoped memory for loss_fn.1']
    #allocation9 [shape = 'u8[512]{0}', space=vmem, size = 0x400, scoped, tag = 'output window, operand 0, single buffered']
    %9 = vsyncpa [#allocation7], 0
    %s10 = scalar_lea.sflag [#allocation7], 1
    %11 = vsyncpa %s10, 0
    %12 = vsyncpa [#allocation8], 0
    loop: start=0, step=1, limit=4
    $region2: #{loss_fn.1} parent=1 // loop_pre_header
      _
    $region3: #{loss_fn.1} parent=1 // loop_header
      %s14 = sphi 0, %s18
      %p15 = scmp.ge.s32.totalorder %s14, 4
      %s21 = sphi 0, %s33
      %s22 = sphi 0, %s29
      %s23 = sphi 0, %s21
      %s24 = sphi 0, %s22
      %s25 = sphi 0, %s23
      %s26 = sphi 0, %s24
      %s36 = sphi 0, %s38
      %s39 = sphi 0, %s36
      %s40 = sphi 0, %s39
      %s56 = sphi 0, %s40
      %s62 = sphi 0, %s64
      %s65 = sphi 0, %s62
      %s66 = sphi 0, %s65
      %s82 = sphi 0, %s66
      %s88 = sphi 0, %s90
      %s91 = sphi 0, %s88
      %s92 = sphi 0, %s91
      %s108 = sphi 0, %s92
      %s114 = sphi 0, %s116
      %s117 = sphi 0, %s114
      %s118 = sphi 0, %s117
      %s134 = sphi 0, %s118
      %s140 = sphi 0, %s142
      %s143 = sphi 0, %s140
      %s144 = sphi 0, %s143
      %s160 = sphi 0, %s144
    $region4: #{loss_fn.1} parent=1 // loop_header_branch
      %17 = sbr.rel (%p15) target = $region8
    $region5: #{loss_fn.1} parent=1 // loop_body
      %s19 = ssub.s32 %s14, 1
      %s20 = ssub.s32 %s14, 2
      %s27 = sadd.s32 1, %s22
      %p28 = scmp.ge.s32.totalorder %s27, 2
      %s29 = scalar_select %p28, 0, %s27
      %s30 = sadd.s32 1, %s21
      %s31 = scalar_select %p28, %s30, %s21
      %p32 = scmp.ge.s32.totalorder %s31, 1
      %s33 = scalar_select %p32, 0, %s31
      %s34 = ssub.s32 %s21, %s33
      %p35 = scmp.eq.s32.totalorder %s34, 0
      %s37 = sadd.s32 %s36, 1
      %s38 = scalar_select %p35, %s36, %s37
      %p41 = pneg %p35
      %p42 = scmp.eq.s32.totalorder %s14, 1
      %p43 = por %p41, %p42
      %p44 = scmp.ne.s32.totalorder %s36, %s39
      %p45 = scmp.eq.s32.totalorder %s14, 0
      %p46 = por %p44, %p45
      %p47 = scmp.ne.s32.totalorder %s36, %s39
      %p48 = scmp.eq.s32.totalorder %s19, 1
      %p49 = por %p47, %p48
      %p50 = scmp.ne.s32.totalorder %s39, %s40
      %p51 = scmp.eq.s32.totalorder %s19, 0
      %p52 = por %p50, %p51
      %p53 = scmp.ne.s32.totalorder %s39, %s40
      %p54 = scmp.eq.s32.totalorder %s20, 1
      %p55 = por %p53, %p54
      %p57 = scmp.ne.s32.totalorder %s40, %s56
      %p58 = scmp.eq.s32.totalorder %s20, 0
      %p59 = por %p57, %p58
      %s60 = ssub.s32 %s21, %s33
      %p61 = scmp.eq.s32.totalorder %s60, 0
      %s63 = sadd.s32 %s62, 1
      %s64 = scalar_select %p61, %s62, %s63
      %p67 = pneg %p61
      %p68 = scmp.eq.s32.totalorder %s14, 1
      %p69 = por %p67, %p68
      %p70 = scmp.ne.s32.totalorder %s62, %s65
      %p71 = scmp.eq.s32.totalorder %s14, 0
      %p72 = por %p70, %p71
      %p73 = scmp.ne.s32.totalorder %s62, %s65
      %p74 = scmp.eq.s32.totalorder %s19, 1
      %p75 = por %p73, %p74
      %p76 = scmp.ne.s32.totalorder %s65, %s66
      %p77 = scmp.eq.s32.totalorder %s19, 0
      %p78 = por %p76, %p77
      %p79 = scmp.ne.s32.totalorder %s65, %s66
      %p80 = scmp.eq.s32.totalorder %s20, 1
      %p81 = por %p79, %p80
      %p83 = scmp.ne.s32.totalorder %s66, %s82
      %p84 = scmp.eq.s32.totalorder %s20, 0
      %p85 = por %p83, %p84
      %s86 = ssub.s32 %s22, %s29
      %p87 = scmp.eq.s32.totalorder %s86, 0
      %s89 = sadd.s32 %s88, 1
      %s90 = scalar_select %p87, %s88, %s89
      %p93 = pneg %p87
      %p94 = scmp.eq.s32.totalorder %s14, 1
      %p95 = por %p93, %p94
      %p96 = scmp.ne.s32.totalorder %s88, %s91
      %p97 = scmp.eq.s32.totalorder %s14, 0
      %p98 = por %p96, %p97
      %p99 = scmp.ne.s32.totalorder %s88, %s91
      %p100 = scmp.eq.s32.totalorder %s19, 1
      %p101 = por %p99, %p100
      %p102 = scmp.ne.s32.totalorder %s91, %s92
      %p103 = scmp.eq.s32.totalorder %s19, 0
      %p104 = por %p102, %p103
      %p105 = scmp.ne.s32.totalorder %s91, %s92
      %p106 = scmp.eq.s32.totalorder %s20, 1
      %p107 = por %p105, %p106
      %p109 = scmp.ne.s32.totalorder %s92, %s108
      %p110 = scmp.eq.s32.totalorder %s20, 0
      %p111 = por %p109, %p110
      %s112 = ssub.s32 %s22, %s29
      %p113 = scmp.eq.s32.totalorder %s112, 0
      %s115 = sadd.s32 %s114, 1
      %s116 = scalar_select %p113, %s114, %s115
      %p119 = pneg %p113
      %p120 = scmp.eq.s32.totalorder %s14, 1
      %p121 = por %p119, %p120
      %p122 = scmp.ne.s32.totalorder %s114, %s117
      %p123 = scmp.eq.s32.totalorder %s14, 0
      %p124 = por %p122, %p123
      %p125 = scmp.ne.s32.totalorder %s114, %s117
      %p126 = scmp.eq.s32.totalorder %s19, 1
      %p127 = por %p125, %p126
      %p128 = scmp.ne.s32.totalorder %s117, %s118
      %p129 = scmp.eq.s32.totalorder %s19, 0
      %p130 = por %p128, %p129
      %p131 = scmp.ne.s32.totalorder %s117, %s118
      %p132 = scmp.eq.s32.totalorder %s20, 1
      %p133 = por %p131, %p132
      %p135 = scmp.ne.s32.totalorder %s118, %s134
      %p136 = scmp.eq.s32.totalorder %s20, 0
      %p137 = por %p135, %p136
      %s138 = ssub.s32 %s21, %s33
      %p139 = scmp.eq.s32.totalorder %s138, 0
      %s141 = sadd.s32 %s140, 1
      %s142 = scalar_select %p139, %s140, %s141
      %p145 = pneg %p139
      %p146 = scmp.eq.s32.totalorder %s14, 1
      %p147 = por %p145, %p146
      %p148 = scmp.ne.s32.totalorder %s140, %s143
      %p149 = scmp.eq.s32.totalorder %s14, 0
      %p150 = por %p148, %p149
      %p151 = scmp.ne.s32.totalorder %s140, %s143
      %p152 = scmp.eq.s32.totalorder %s19, 1
      %p153 = por %p151, %p152
      %p154 = scmp.ne.s32.totalorder %s143, %s144
      %p155 = scmp.eq.s32.totalorder %s19, 0
      %p156 = por %p154, %p155
      %p157 = scmp.ne.s32.totalorder %s143, %s144
      %p158 = scmp.eq.s32.totalorder %s20, 1
      %p159 = por %p157, %p158
      %p161 = scmp.ne.s32.totalorder %s144, %s160
      %p162 = scmp.eq.s32.totalorder %s20, 0
      %p163 = por %p161, %p162
      %p164 = scmp.le.s32.totalorder 1, %s14
      %p165 = scmp.lt.s32.totalorder %s14, 3
      %p166 = pnand %p164, %p165
      %p167 = pneg %p166
      // Predicated region
      $region9: #{loss_fn.1} parent=5 // pred_check
        _
      $region10: #{loss_fn.1} parent=5 // pred_check_branch
        %169 = sbr.rel (%p166) target = $region12
      $region11: #{loss_fn.1} parent=5 // pred_region
        %s170 = ssub.s32 %s14, 1
        // Predicated region
        $region13: #{loss_fn.1} parent=11 // pred_check
          %p171 = pneg %p52
        $region14: #{loss_fn.1} parent=11 // pred_check_branch
          %173 = sbr.rel (%p171) target = $region16
        $region15: #{loss_fn.1} parent=11 // pred_region
          %s174 = smul.u32 2, %s23
          %p175 = scmp.lt.s32.totalorder %s174, 1
          %s176 = scalar_select %p175, %s174, 1
          %s177 = smul.addr %s176, 4
          %s178 = scalar_lea.vmem %s0, %s177
          %s179 = smul.u32 2, %s23
        $region16: #{loss_fn.1} parent=11 // pred_fallthru
          _
        // Predicated region
        $region17: #{loss_fn.1} parent=11 // pred_check
          %p180 = pneg %p78
        $region18: #{loss_fn.1} parent=11 // pred_check_branch
          %182 = sbr.rel (%p180) target = $region20
        $region19: #{loss_fn.1} parent=11 // pred_region
          %s183 = smul.u32 2, %s23
          %p184 = scmp.lt.s32.totalorder %s183, 1
          %s185 = scalar_select %p184, %s183, 1
          %s186 = smul.addr %s185, 4
          %s187 = scalar_lea.vmem %s1, %s186
          %s188 = smul.u32 2, %s23
        $region20: #{loss_fn.1} parent=11 // pred_fallthru
          _
      $region12: #{loss_fn.1} parent=5 // pred_fallthru
        _
      %p189 = scmp.lt.s32.totalorder %s14, 2
      // Predicated region
      $region21: #{loss_fn.1} parent=5 // pred_check
        %p190 = pneg %p189
      $region22: #{loss_fn.1} parent=5 // pred_check_branch
        %192 = sbr.rel (%p190) target = $region24
      $region23: #{loss_fn.1} parent=5 // pred_region
        // Predicated region
        $region25: #{loss_fn.1} parent=23 // pred_check
          %p193 = pneg %p98
        $region26: #{loss_fn.1} parent=23 // pred_check_branch
          %195 = sbr.rel (%p193) target = $region28
        $region27: #{loss_fn.1} parent=23 // pred_region
          %s196 = sand.u32 %s88, 1
          %s197 = scalar_lea.sflag [#allocation7], %s196
          %s198 = sand.u32 %s88, 1
          %s199 = smul.addr %s198, 32
          %s200 = scalar_lea.vmem [#allocation6], %s199
          %s201 = smul.u32 2, %s22
          %203 = vsyncadd %s197, 0
          %s204 = smul.addr %s201, 4
          %s205 = scalar_lea.hbm %s2, %s204
          %s206 = sshll.u32 %s205, 4
          %s207 = int_to_ptr.hbm [resolvable:$true] %s206
          %s208 = sshll.u32 %s200, 4
          %s209 = int_to_ptr.vmem [resolvable:$true] %s208
          %214 = dma.hbm_to_vmem [thread:$0]  %s207, 512, %s209, %s197, 256, 128, 8
        $region28: #{loss_fn.1} parent=23 // pred_fallthru
          _
        // Predicated region
        $region29: #{loss_fn.1} parent=23 // pred_check
          %p215 = pneg %p124
        $region30: #{loss_fn.1} parent=23 // pred_check_branch
          %217 = sbr.rel (%p215) target = $region32
        $region31: #{loss_fn.1} parent=23 // pred_region
          %p218 = scmp.lt.s32.totalorder %s22, 1
          %s219 = scalar_select %p218, %s22, 1
          %s220 = scalar_lea.vmem %s3, %s219
        $region32: #{loss_fn.1} parent=23 // pred_fallthru
          _
      $region24: #{loss_fn.1} parent=5 // pred_fallthru
        _
      %p221 = scmp.le.s32.totalorder 1, %s14
      %p222 = scmp.lt.s32.totalorder %s14, 3
      %p223 = pnand %p221, %p222
      %p224 = pneg %p223
      // Predicated region
      $region33: #{loss_fn.1} parent=5 // pred_check
        _
      $region34: #{loss_fn.1} parent=5 // pred_check_branch
        %226 = sbr.rel (%p223) target = $region36
      $region35: #{loss_fn.1} parent=5 // pred_region
        %s227 = ssub.s32 %s14, 1
        %s228 = sand.u32 %s91, 1
        %s229 = scalar_lea.sflag [#allocation7], %s228
        %s230 = sand.u32 %s91, 1
        %s231 = smul.addr %s230, 32
        %s232 = scalar_lea.vmem [#allocation6], %s231
        // Predicated region
        $region37: #{loss_fn.1} parent=35 // pred_check
          %p233 = pneg %p104
        $region38: #{loss_fn.1} parent=35 // pred_check_branch
          %235 = sbr.rel (%p233) target = $region40
        $region39: #{loss_fn.1} parent=35 // pred_region
          %237 = dma.done %s229, 512
        $region40: #{loss_fn.1} parent=35 // pred_fallthru
          _
        %s238 = smul.u32 2, %s23
        %p239 = scmp.lt.s32.totalorder %s238, 1
        %s240 = scalar_select %p239, %s238, 1
        %s241 = smul.addr %s240, 4
        %s242 = scalar_lea.vmem %s0, %s241
        %p243 = pneg %p52
        %p244 = pneg %p49
        %s245 = smul.u32 2, %s23
        %p246 = scmp.lt.s32.totalorder %s245, 1
        %s247 = scalar_select %p246, %s245, 1
        %s248 = smul.addr %s247, 4
        %s249 = scalar_lea.vmem %s1, %s248
        %p250 = pneg %p78
        %p251 = pneg %p75
        %s252 = sand.u32 %s91, 1
        %s253 = scalar_lea.sflag [#allocation7], %s252
        %s254 = sand.u32 %s91, 1
        %s255 = smul.addr %s254, 32
        %s256 = scalar_lea.vmem [#allocation6], %s255
        %p257 = pneg %p104
        %p258 = pneg %p101
        %p259 = scmp.lt.s32.totalorder %s24, 1
        %s260 = scalar_select %p259, %s24, 1
        %s261 = scalar_lea.vmem %s3, %s260
        %p262 = pneg %p130
        %p263 = pneg %p127
        %p264 = pneg %p156
        %p265 = pneg %p153
        %s266 = smul.u32 2, %s23
        %p267 = scmp.lt.s32.totalorder %s266, 1
        %s268 = scalar_select %p267, %s266, 1
        %s269 = smul.addr %s268, 4
        %s270 = scalar_lea.vmem %s0, %s269
        %s271 = smul.u32 2, %s23
        %s272 = smul.u32 2, %s23
        %p273 = scmp.lt.s32.totalorder %s272, 1
        %s274 = scalar_select %p273, %s272, 1
        %s275 = smul.addr %s274, 4
        %s276 = scalar_lea.vmem %s1, %s275
        %s277 = smul.u32 2, %s23
        %s278 = smul.u32 2, %s24
        %p279 = scmp.lt.s32.totalorder %s24, 1
        %s280 = scalar_select %p279, %s24, 1
        %s281 = scalar_lea.vmem %s3, %s280
        %p284 = scmp.eq.s32.totalorder %s24, 0
        // Predicated region
        $region41: #{loss_fn.1} parent=35 // pred_check
          %p285 = pneg %p284
        $region42: #{loss_fn.1} parent=35 // pred_check_branch
          %287 = sbr.rel (%p285) target = $region44
        $region43: #{loss_fn.1} parent=35 // pred_region
          %vm288 = vcmask 7168
          %289 = vst.msk [vmem:[#allocation2] sm:$0xff] %vm288, 0.0
          %290 = vst.msk [vmem:[#allocation2 + $0x8] sm:$0xff] %vm288, 0.0
          %291 = vst.msk [vmem:[#allocation3] sm:$0xff] %vm288, 0.0
          %292 = vst.msk [vmem:[#allocation3 + $0x8] sm:$0xff] %vm288, 0.0
          %293 = vst.msk [vmem:[#allocation4] sm:$0xff] %vm288, 0.0
          %294 = vst.msk [vmem:[#allocation4 + $0x8] sm:$0xff] %vm288, 0.0
          %295 = vst.msk [vmem:[#allocation5] sm:$0xff] %vm288, 0.0
          %296 = vst.msk [vmem:[#allocation5 + $0x8] sm:$0xff] %vm288, 0.0
        $region44: #{loss_fn.1} parent=35 // pred_fallthru
          _
        %v297 = vld [vmem:[%s270] sm:$0xf]
        %v298 = vld [vmem:[%s270 + $0x4] sm:$0xf]
        %v299 = vld [vmem:[%s232] sm:$0xff]
        %v300 = vld [vmem:[%s232 + $0x8] sm:$0xff]
        %v301 = vld [vmem:[%s232 + $0x10] sm:$0xff]
        %v302 = vld [vmem:[%s232 + $0x18] sm:$0xff]
        %v305 = vunpack.c.l.b16 %v297
        %v306 = vunpack.c.l.b16 %v298
        %v307 = vpack.c.b16 %v306, %v305
        %v312 = vunpack.c.l.b16 %v299
        %v313 = vunpack.c.h.b16 %v299
        %v314 = vunpack.c.l.b16 %v300
        %v315 = vunpack.c.h.b16 %v300
        %v316 = vunpack.c.l.b16 %v301
        %v317 = vunpack.c.h.b16 %v301
        %v318 = vunpack.c.l.b16 %v302
        %v319 = vunpack.c.h.b16 %v302
        %v320 = vpack.c.b16 %v314, %v312
        %v321 = vpack.c.b16 %v315, %v313
        %v322 = vpack.c.b16 %v318, %v316
        %v323 = vpack.c.b16 %v319, %v317
        %vm328 = vcmask 261120
        %v330 = vsel %vm328, %v307, 0
        %332 = vmatpush.bf16.msra.mxu0 0
        %333 = vmatpush.bf16.msra.mxu0 0
        %334 = vmatpush.bf16.msra.mxu0 0
        %335 = vmatpush.bf16.msra.mxu0 0
        %336 = vmatpush.bf16.msra.mxu0 0
        %337 = vmatpush.bf16.msra.mxu0 0
        %338 = vmatpush.bf16.msra.mxu0 %v322
        %339 = vmatpush.bf16.msra.mxu0 %v320
        %340 = vmatmul.bf16.gmra.mxu0 %v330
        %v341 = vpop.f32.mrf.mxu0
        %v342 = vadd.f32 0.0, %v341
        %v343 = vpop.f32.mrf.mxu0
        %v344 = vadd.f32 0.0, %v343
        %345 = vdwg.mxu0
        %346 = vmatpush.bf16.msra.mxu0 0
        %347 = vmatpush.bf16.msra.mxu0 0
        %348 = vmatpush.bf16.msra.mxu0 0
        %349 = vmatpush.bf16.msra.mxu0 0
        %350 = vmatpush.bf16.msra.mxu0 0
        %351 = vmatpush.bf16.msra.mxu0 0
        %352 = vmatpush.bf16.msra.mxu0 %v323
        %353 = vmatpush.bf16.msra.mxu0 %v321
        %354 = vmatmul.bf16.gmra.mxu0 %v330
        %v355 = vpop.f32.mrf.mxu0
        %v356 = vadd.f32 0.0, %v355
        %v357 = vpop.f32.mrf.mxu0
        %v358 = vadd.f32 0.0, %v357
        %359 = vdwg.mxu0
        %v360 = vpack.c.bf16 %v342, %v342
        %v361 = vpack.c.bf16 %v344, %v344
        %v362 = vxor.u32 %v360, 2147516416
        %v363 = vxor.u32 %v361, 2147516416
        %v364 = vunpack.c.l.bf16 %v362
        %v365 = vunpack.c.l.bf16 %v363
        %v366 = vmul.f32 %v364, 1.442695
        %v367 = vpow.pop %v366
        %v368 = vmul.f32 %v365, 1.442695
        %v369 = vpow.pop %v368
        %v370 = vpack.c.bf16 %v367, %v367
        %v371 = vpack.c.bf16 %v369, %v369
        %v372 = vunpack.c.l.bf16 %v370
        %v373 = vunpack.c.l.bf16 %v371
        %v374 = vadd.f32 %v372, 1.0
        %v375 = vadd.f32 %v373, 1.0
        %v376 = vpack.c.bf16 %v374, %v374
        %v377 = vpack.c.bf16 %v375, %v375
        %v378 = vunpack.c.h.bf16 1065369472
        %v379 = vunpack.c.l.bf16 1065369472
        %v380 = vunpack.c.h.bf16 %v376
        %v381 = vunpack.c.l.bf16 %v376
        %v382 = vrcp.pop %v380
        %v383 = vmul.f32 %v378, %v382
        %v384 = vrcp.pop %v381
        %v385 = vmul.f32 %v379, %v384
        %v386 = vpack.c.bf16 %v383, %v385
        %v387 = vunpack.c.h.bf16 %v377
        %v388 = vunpack.c.l.bf16 %v377
        %v389 = vrcp.pop %v387
        %v390 = vmul.f32 %v378, %v389
        %v391 = vrcp.pop %v388
        %v392 = vmul.f32 %v379, %v391
        %v393 = vpack.c.bf16 %v390, %v392
        %v394 = vpack.c.bf16 %v356, %v356
        %v395 = vpack.c.bf16 %v358, %v358
        %v396 = vxor.u32 %v394, 2147516416
        %v397 = vxor.u32 %v395, 2147516416
        %v398 = vunpack.c.l.bf16 %v396
        %v399 = vunpack.c.l.bf16 %v397
        %v400 = vmul.f32 %v398, 1.442695
        %v401 = vpow.pop %v400
        %v402 = vmul.f32 %v399, 1.442695
        %v403 = vpow.pop %v402
        %v404 = vpack.c.bf16 %v401, %v401
        %v405 = vpack.c.bf16 %v403, %v403
        %v406 = vunpack.c.l.bf16 %v404
        %v407 = vunpack.c.l.bf16 %v405
        %v408 = vadd.f32 %v406, 1.0
        %v409 = vadd.f32 %v407, 1.0
        %v410 = vpack.c.bf16 %v408, %v408
        %v411 = vpack.c.bf16 %v409, %v409
        %v412 = vunpack.c.h.bf16 %v410
        %v413 = vunpack.c.l.bf16 %v410
        %v414 = vrcp.pop %v412
        %v415 = vmul.f32 %v378, %v414
        %v416 = vrcp.pop %v413
        %v417 = vmul.f32 %v379, %v416
        %v418 = vpack.c.bf16 %v415, %v417
        %v419 = vunpack.c.h.bf16 %v411
        %v420 = vunpack.c.l.bf16 %v411
        %v421 = vrcp.pop %v419
        %v422 = vmul.f32 %v378, %v421
        %v423 = vrcp.pop %v420
        %v424 = vmul.f32 %v379, %v423
        %v425 = vpack.c.bf16 %v422, %v424
        %v426 = vld [vmem:[%s281] sm:$0x1]
        %p427 = scmp.lt.s32.totalorder %s24, 1
        // Predicated region
        $region45: #{loss_fn.1} parent=35 // pred_check
          %p428 = pneg %p427
        $region46: #{loss_fn.1} parent=35 // pred_check_branch
          %430 = sbr.rel (%p428) target = $region48
        $region47: #{loss_fn.1} parent=35 // pred_region
          %v431 = vunpack.c.l.bf16 %v386
          %v432 = vunpack.c.l.bf16 %v393
          %v433 = vunpack.c.l.bf16 %v418
          %v434 = vunpack.c.l.bf16 %v425
          %v435 = vsub.f32 %v431, %v433
          %v436 = vsub.f32 %v432, %v434
          %v437 = vpack.c.bf16 %v435, %v435
          %v438 = vpack.c.bf16 %v436, %v436
          %v439 = vunpack.c.l.bf16 %v437
          %v440 = vunpack.c.l.bf16 %v438
          %v441 = vmax.f32 %v439, 0.0
          %v442 = vmax.f32 %v440, 0.0
          %v443 = vpack.c.bf16 %v441, %v441
          %v444 = vpack.c.bf16 %v442, %v442
          %v445 = vunpack.c.l.bf16 %v443
          %v446 = vunpack.c.l.bf16 %v444
          %v447 = vmul.f32 %v445, 1.442695
          %v448 = vpow.pop %v447
          %v449 = vmul.f32 %v446, 1.442695
          %v450 = vpow.pop %v449
          %v451 = vpack.c.bf16 %v448, %v448
          %v452 = vpack.c.bf16 %v450, %v450
          %v453 = vunpack.c.l.bf16 %v451
          %v454 = vunpack.c.l.bf16 %v452
          %v456 = vperm.slane %v426, 0
          %v458 = vmul.f32 %v453, %v456
          %v459 = vmul.f32 %v454, %v456
          %v460 = vld [vmem:[#allocation3] sm:$0xff]
          %v461 = vld [vmem:[#allocation3 + $0x8] sm:$0xff]
          %462 = vadd.xlane.f32.xlu0 %v458
          %v463 = vpop.xlane.xlu0 %462
          %464 = vadd.xlane.f32.xlu0 %v459
          %v465 = vpop.xlane.xlu0 %464
          %v466 = vadd.f32 %v460, %v463
          %v467 = vadd.f32 %v461, %v465
          %vm468 = vcmask 7168
          %469 = vst.msk [vmem:[#allocation3] sm:$0xff] %vm468, %v466
          %470 = vst.msk [vmem:[#allocation3 + $0x8] sm:$0xff] %vm468, %v467
          %v471 = vld [vmem:[#allocation2] sm:$0xff]
          %v472 = vld [vmem:[#allocation2 + $0x8] sm:$0xff]
          %v473 = vmul.f32 %v458, %v445
          %v474 = vmul.f32 %v459, %v446
          %475 = vadd.xlane.f32.xlu0 %v473
          %v476 = vpop.xlane.xlu0 %475
          %477 = vadd.xlane.f32.xlu0 %v474
          %v478 = vpop.xlane.xlu0 %477
          %v479 = vadd.f32 %v471, %v476
          %v480 = vadd.f32 %v472, %v478
          %481 = vst.msk [vmem:[#allocation2] sm:$0xff] %vm468, %v479
          %482 = vst.msk [vmem:[#allocation2 + $0x8] sm:$0xff] %vm468, %v480
        $region48: #{loss_fn.1} parent=35 // pred_fallthru
          _
        %p483 = scmp.ge.s32.totalorder %s24, 1
        // Predicated region
        $region49: #{loss_fn.1} parent=35 // pred_check
          %p484 = pneg %p483
        $region50: #{loss_fn.1} parent=35 // pred_check_branch
          %486 = sbr.rel (%p484) target = $region52
        $region51: #{loss_fn.1} parent=35 // pred_region
          %v487 = vunpack.c.l.bf16 %v418
          %v488 = vunpack.c.l.bf16 %v425
          %v489 = vsub.f32 1.0, %v487
          %v490 = vsub.f32 1.0, %v488
          %v491 = vpack.c.bf16 %v489, %v489
          %v492 = vpack.c.bf16 %v490, %v490
          %v493 = vunpack.c.l.bf16 %v386
          %v494 = vunpack.c.l.bf16 %v393
          %v495 = vunpack.c.l.bf16 %v491
          %v496 = vunpack.c.l.bf16 %v492
          %v497 = vsub.f32 %v493, %v495
          %v498 = vsub.f32 %v494, %v496
          %v499 = vpack.c.bf16 %v497, %v497
          %v500 = vpack.c.bf16 %v498, %v498
          %v501 = vunpack.c.l.bf16 %v499
          %v502 = vunpack.c.l.bf16 %v500
          %v503 = vmax.f32 %v501, 0.0
          %v504 = vmax.f32 %v502, 0.0
          %v505 = vpack.c.bf16 %v503, %v503
          %v506 = vpack.c.bf16 %v504, %v504
          %v507 = vunpack.c.l.bf16 %v505
          %v508 = vunpack.c.l.bf16 %v506
          %v509 = vmul.f32 %v507, 1.442695
          %v510 = vpow.pop %v509
          %v511 = vmul.f32 %v508, 1.442695
          %v512 = vpow.pop %v511
          %v513 = vpack.c.bf16 %v510, %v510
          %v514 = vpack.c.bf16 %v512, %v512
          %v515 = vunpack.c.l.bf16 %v513
          %v516 = vunpack.c.l.bf16 %v514
          %v518 = vperm.slane %v426, 0
          %v520 = vmul.f32 %v515, %v518
          %v521 = vmul.f32 %v516, %v518
          %v522 = vld [vmem:[#allocation5] sm:$0xff]
          %v523 = vld [vmem:[#allocation5 + $0x8] sm:$0xff]
          %524 = vadd.xlane.f32.xlu0 %v520
          %v525 = vpop.xlane.xlu0 %524
          %526 = vadd.xlane.f32.xlu0 %v521
          %v527 = vpop.xlane.xlu0 %526
          %v528 = vadd.f32 %v522, %v525
          %v529 = vadd.f32 %v523, %v527
          %vm530 = vcmask 7168
          %531 = vst.msk [vmem:[#allocation5] sm:$0xff] %vm530, %v528
          %532 = vst.msk [vmem:[#allocation5 + $0x8] sm:$0xff] %vm530, %v529
          %v533 = vld [vmem:[#allocation4] sm:$0xff]
          %v534 = vld [vmem:[#allocation4 + $0x8] sm:$0xff]
          %v535 = vmul.f32 %v520, %v507
          %v536 = vmul.f32 %v521, %v508
          %537 = vadd.xlane.f32.xlu0 %v535
          %v538 = vpop.xlane.xlu0 %537
          %539 = vadd.xlane.f32.xlu0 %v536
          %v540 = vpop.xlane.xlu0 %539
          %v541 = vadd.f32 %v533, %v538
          %v542 = vadd.f32 %v534, %v540
          %543 = vst.msk [vmem:[#allocation4] sm:$0xff] %vm530, %v541
          %544 = vst.msk [vmem:[#allocation4 + $0x8] sm:$0xff] %vm530, %v542
        $region52: #{loss_fn.1} parent=35 // pred_fallthru
          _
        %p545 = scmp.eq.s32.totalorder %s24, 1
        // Predicated region
        $region53: #{loss_fn.1} parent=35 // pred_check
          %p546 = pneg %p545
        $region54: #{loss_fn.1} parent=35 // pred_check_branch
          %548 = sbr.rel (%p546) target = $region56
        $region55: #{loss_fn.1} parent=35 // pred_region
          %v549 = vld [vmem:[%s270] sm:$0xf]
          %v550 = vld [vmem:[%s270 + $0x4] sm:$0xf]
          %v551 = vunpack.c.l.bf16 %v549
          %v552 = vunpack.c.l.bf16 %v550
          %v553 = vld [vmem:[%s276] sm:$0xf]
          %v554 = vld [vmem:[%s276 + $0x4] sm:$0xf]
          %v555 = vunpack.c.l.bf16 %v553
          %v556 = vunpack.c.l.bf16 %v554
          %v557 = vmax.f32 %v551, 0.0
          %v558 = vmax.f32 %v552, 0.0
          %v559 = vmul.f32 %v551, %v555
          %v560 = vmul.f32 %v552, %v556
          %v561 = vsub.f32 %v557, %v559
          %v562 = vsub.f32 %v558, %v560
          %v563 = vand.u32 2147483647, %v551
          %v564 = vand.u32 2147483647, %v552
          %v565 = vsub.f32 0.0, %v563
          %v566 = vsub.f32 0.0, %v564
          %v567 = vmul.f32 %v565, 1.442695
          %v568 = vpow.pop %v567
          %v569 = vmul.f32 %v566, 1.442695
          %v570 = vpow.pop %v569
          %v571 = vadd.f32 %v568, 1.0
          %v572 = vadd.f32 %v570, 1.0
          %v573 = vlog2.pop %v571
          %v574 = vmul.f32 %v573, 0.6931472
          %v575 = vlog2.pop %v572
          %v576 = vmul.f32 %v575, 0.6931472
          %v577 = vadd.f32 %v561, %v574
          %v578 = vadd.f32 %v562, %v576
          %v579 = vsel %vm328, %v577, 0.0
          %580 = vadd.xlane.f32.xlu0 %v579
          %v581 = vpop.xlane.xlu0 %580
          %v582 = vsel %vm328, %v578, 0.0
          %583 = vadd.xlane.f32.xlu0 %v582
          %v584 = vpop.xlane.xlu0 %583
          %v585 = vadd.f32 %v581, %v584
          %v586 = vrot.slane %v585, 4
          %v587 = vadd.f32 %v585, %v586
          %v588 = vrot.slane %v587, 2
          %v589 = vadd.f32 %v587, %v588
          %v590 = vrot.slane %v589, 1
          %v591 = vadd.f32 %v589, %v590
          %v592 = vld [vmem:[#allocation2] sm:$0xff]
          %v593 = vld [vmem:[#allocation2 + $0x8] sm:$0xff]
          %v594 = vld [vmem:[#allocation3] sm:$0xff]
          %v595 = vld [vmem:[#allocation3 + $0x8] sm:$0xff]
          %v596 = vrcp.pop %v594
          %v597 = vrcp.pop %v595
          %v598 = vmul.f32 %v592, %v596
          %v599 = vmul.f32 %v593, %v597
          %v600 = vadd.f32 %v598, 0.0
          %v601 = vadd.f32 %v599, 0.0
          %v602 = vld [vmem:[#allocation4] sm:$0xff]
          %v603 = vld [vmem:[#allocation4 + $0x8] sm:$0xff]
          %v604 = vld [vmem:[#allocation5] sm:$0xff]
          %v605 = vld [vmem:[#allocation5 + $0x8] sm:$0xff]
          %v606 = vrcp.pop %v604
          %v607 = vrcp.pop %v605
          %v608 = vmul.f32 %v602, %v606
          %v609 = vmul.f32 %v603, %v607
          %v610 = vadd.f32 %v600, %v608
          %v611 = vadd.f32 %v601, %v609
          %vm612 = vcmask 7168
          %v613 = vsel %vm612, %v610, 0.0
          %v614 = vsel %vm612, %v611, 0.0
          %v615 = vadd.f32 %v613, %v614
          %v616 = vrot.slane %v615, 4
          %v617 = vadd.f32 %v615, %v616
          %v618 = vrot.slane %v617, 2
          %v619 = vadd.f32 %v617, %v618
          %v620 = vrot.slane %v619, 1
          %v621 = vadd.f32 %v619, %v620
          %v622 = vmul.f32 %v591, 0.015625
          %v623 = vmul.f32 %v621, 0.5
          %v624 = vadd.f32 %v622, %v623
          %626 = vset.pattern.permute.xlu0 0
          %627 = vperm.xlu0 %626, %v624
          %v628 = vpop.permute.xlu0 %627
          %630 = vst [vmem:[#allocation9] sm:$0x1] %v628
        $region56: #{loss_fn.1} parent=35 // pred_fallthru
          _
        // Predicated region
        $region57: #{loss_fn.1} parent=35 // pred_check
          %p631 = pneg %p153
        $region58: #{loss_fn.1} parent=35 // pred_check_branch
          %633 = sbr.rel (%p631) target = $region60
        $region59: #{loss_fn.1} parent=35 // pred_region
          %635 = vsyncadd [#allocation8], 0
          %s636 = scalar_lea.hbm %s4, %s23
          %s638 = sshll.u32 [#allocation9], 4
          %s639 = int_to_ptr.vmem [resolvable:$true] %s638
          %s640 = sshll.u32 %s636, 4
          %s641 = int_to_ptr.hbm [resolvable:$true] %s640
          %643 = dma.vmem_to_hbm [thread:$0]  %s639, 16, %s641, [#allocation8]
        $region60: #{loss_fn.1} parent=35 // pred_fallthru
          _
        // Predicated region
        $region61: #{loss_fn.1} parent=35 // pred_check
          %p644 = pneg %p153
        $region62: #{loss_fn.1} parent=35 // pred_check_branch
          %646 = sbr.rel (%p644) target = $region64
        $region63: #{loss_fn.1} parent=35 // pred_region
          %648 = dma.done [#allocation8], 16
        $region64: #{loss_fn.1} parent=35 // pred_fallthru
          _
      $region36: #{loss_fn.1} parent=5 // pred_fallthru
        _
      %p649 = scmp.le.s32.totalorder 2, %s14
      // Predicated region
      $region65: #{loss_fn.1} parent=5 // pred_check
        %p650 = pneg %p649
      $region66: #{loss_fn.1} parent=5 // pred_check_branch
        %652 = sbr.rel (%p650) target = $region68
      $region67: #{loss_fn.1} parent=5 // pred_region
        %s653 = ssub.s32 %s14, 2
      $region68: #{loss_fn.1} parent=5 // pred_fallthru
        _
    $region6: #{loss_fn.1} parent=1 // loop_footer
      %s18 = sadd.s32 1, %s14
    $region7: #{loss_fn.1} parent=1 // loop_footer_branch
      %13 = sbr.rel target = $region3
    $region8: #{loss_fn.1} parent=1 // loop_exit
      _
    %654 = vsyncpa [#allocation7], 1
    %s655 = scalar_lea.sflag [#allocation7], 1
    %656 = vsyncpa %s655, 1
    %657 = vsyncpa [#allocation8], 1
    %s658 = scalar_lea.sflag [#allocation8], 1
    %659 = vsyncpa %s658, 1

</llo_original>
